<compile_context>
chip_gen: v6e
topology: v6e:2x2x1
jax: 0.10.0
libtpu: 0.0.40
codegen_flags: <defaults>
</compile_context>

<pallas_src>
import functools

import jax
import jax.numpy as jnp
from jax.experimental import pallas as pl
from jax.experimental.pallas import tpu as pltpu

LANES = 128
_MIB = 1024 * 1024


def _round_up(x: int, m: int) -> int:
    return ((x + m - 1) // m) * m


def _sublane_multiple(dtype) -> int:
    # Minimal legal sublane tile multiple per dtype packing.
    itemsize = jnp.dtype(dtype).itemsize
    return {4: 8, 2: 16, 1: 32}.get(itemsize, 8)


def _chip_config():
    """(num_tensorcores, vmem_capacity_bytes) with safe fallbacks.

    Heuristic: 64 MiB VMEM per TensorCore => v7x-class chip with 2 TCs;
    128 MiB => single-TC v5e/v6e.
    """
    vmem_cap = 128 * _MIB
    try:
        info = pltpu.get_tpu_info()
        vmem_cap = int(getattr(info, "vmem_capacity_bytes", vmem_cap))
    except Exception:
        pass
    num_tc = 2 if vmem_cap <= 64 * _MIB else 1
    return num_tc, vmem_cap


def _mape_kernel(o_ref, t_ref, out_ref, acc_ref, *,
                 rows, tm, tiles_per_split, needs_mask):
    j = pl.program_id(1)

    # Reset the per-split vector accumulator at the start of each split.
    @pl.when(j == 0)
    def _():
        acc_ref[...] = jnp.zeros_like(acc_ref)

    # Cast in-vreg (inputs stream in their native dtype).
    o = o_ref[...].astype(jnp.float32)
    t = t_ref[...].astype(jnp.float32)

    # |(t - o) / t| via EUP reciprocal + VALU multiply (approx=False keeps
    # full f32 accuracy; approx=True would trade ~1e-4 rel error for fewer
    # Newton-refinement multiplies).
    ape = jnp.abs((t - o) * pl.reciprocal(t, approx=False))

    if needs_mask:
        # NOTE: tile_id MUST use the *unclamped* program-id based index even
        # though the BlockSpec index_map clamps duplicated tail tiles -- that
        # unclamped index is what drives valid_rows <= 0 and zeroes out the
        # re-read duplicate / partial tiles. Do not "simplify" this.
        tile_id = pl.program_id(0) * tiles_per_split + j
        valid_rows = rows - tile_id * tm          # <= 0 for clamped duplicates
        row_ids = jax.lax.broadcasted_iota(jnp.int32, (tm, LANES), 0)
        # jnp.where is a select, so inf/nan from garbage tail rows cannot leak.
        ape = jnp.where(row_ids < valid_rows, ape, jnp.float32(0.0))

    # Pure vreg adds into an (8, LANES) accumulator: no per-step XLU reduce,
    # no serialized carry through a single (1, 128) vreg.
    acc_ref[...] += ape.reshape(tm // 8, 8, LANES).sum(axis=0)

    # Write this split's partial-sum slab once, at the last step.
    @pl.when(j == pl.num_programs(1) - 1)
    def _():
        out_ref[...] = acc_ref[...].reshape(out_ref.shape)


def mape_loss(output: jax.Array, target: jax.Array) -> jax.Array:
    """Mean absolute percentage error, computed in a Pallas TPU kernel.

    output/target: any matching shape (e.g. NCHW). Returns a float32 scalar.
    """
    assert output.shape == target.shape, "output/target shapes must match"
    total_n = output.size

    flat_o = output.reshape(-1)   # free: contiguous reshape, native dtype
    flat_t = target.reshape(-1)

    # Only pad if the element count is not a multiple of 128. Padded lanes use
    # value 1 on BOTH tensors -> |(1-1)/1| = 0, so no in-kernel lane mask.
    lane_pad = (-total_n) % LANES
    if lane_pad:
        flat_o = jnp.pad(flat_o, (0, lane_pad), constant_values=1)
        flat_t = jnp.pad(flat_t, (0, lane_pad), constant_values=1)

    rows = flat_o.size // LANES
    o2d = flat_o.reshape(rows, LANES)
    t2d = flat_t.reshape(rows, LANES)

    num_tc, vmem_cap = _chip_config()

    # Row tile: as large as a chip-aware double-buffer budget allows.
    #   1 TC (v5e/v6e): 16 MiB of input buffers -> tm = 8192 for f32
    #   2 TC (v7x)    : 32 MiB of input buffers -> tm = 16384 for f32
    isz_total = (jnp.dtype(output.dtype).itemsize
                 + jnp.dtype(target.dtype).itemsize)
    buf_budget = (32 if num_tc == 2 else 16) * _MIB
    sub = max(_sublane_multiple(output.dtype), _sublane_multiple(target.dtype))
    tm_max = max(32, (buf_budget // (2 * LANES * isz_total)) // 32 * 32)
    tm = min(tm_max, _round_up(rows, sub))

    num_tiles = pl.cdiv(rows, tm)
    # Split across TensorCores only on 2-TC chips; on 1-TC chips a split just
    # adds a clamped duplicate tile of masked-to-zero HBM traffic.
    n_split = 2 if (num_tc == 2 and num_tiles >= 2) else 1
    tiles_per_split = pl.cdiv(num_tiles, n_split)

    # Masking is only needed for a partial last tile or a duplicated clamped
    # tile; compile it out entirely when the tiling is exact.
    needs_mask = (rows % tm != 0) or (num_tiles % n_split != 0)

    def in_index_map(s, j):
        t_idx = s * tiles_per_split + j
        # Clamp duplicated tail tiles of the last split; their contribution is
        # masked to zero inside the kernel (via the UNclamped tile_id there).
        return (jnp.minimum(t_idx, num_tiles - 1), 0)

    # Explicit VMEM limit so the large double-buffered blocks fit v5e's 16 MiB
    # default scoped limit, while staying well under v7x's 64 MiB physical.
    buffer_bytes = 2 * tm * LANES * isz_total        # o + t, double buffered
    vmem_limit = int(min(max(buffer_bytes + 8 * _MIB, 16 * _MIB),
                         (vmem_cap * 5) // 8))

    if n_split == 2:
        # Shard the split axis across the two TensorCores of a v7x chip.
        dim_sem = (pltpu.CORE_PARALLEL, pltpu.ARBITRARY)
    else:
        dim_sem = ("arbitrary", "arbitrary")

    kernel = functools.partial(
        _mape_kernel, rows=rows, tm=tm, tiles_per_split=tiles_per_split,
        needs_mask=needs_mask)

    partials = pl.pallas_call(
        kernel,
        out_shape=jax.ShapeDtypeStruct((n_split, 8, LANES), jnp.float32),
        grid_spec=pltpu.PrefetchScalarGridSpec(
            num_scalar_prefetch=0,
            grid=(n_split, tiles_per_split),
            in_specs=[
                pl.BlockSpec((tm, LANES), in_index_map),
                pl.BlockSpec((tm, LANES), in_index_map),
            ],
            out_specs=pl.BlockSpec((1, 8, LANES), lambda s, j: (s, 0, 0)),
            scratch_shapes=[pltpu.VMEM((8, LANES), jnp.float32)],
        ),
        compiler_params=pltpu.CompilerParams(
            dimension_semantics=dim_sem,
            vmem_limit_bytes=vmem_limit,
        ),
    )(o2d, t2d)

    # Tiny cross-sublane/-lane/-split reduce + mean in the wrapper.
    return jnp.sum(partials) / jnp.float32(total_n)


if __name__ == "__main__":
    key = jax.random.PRNGKey(0)
    k1, k2 = jax.random.split(key)
    # NCHW-style inputs, consistent with typical use of the loss on images.
    x_shape = (2, 4, 16, 16)
    output = jax.random.normal(k1, x_shape, dtype=jnp.float32)
    # Keep targets away from zero (MAPE must not be used on standardized data).
    target = jax.random.uniform(k2, x_shape, dtype=jnp.float32,
                                minval=0.5, maxval=2.0)

    loss = mape_loss(output, target)
    jax.block_until_ready(loss)

    # Pure-JAX reference check.
    ref = jnp.mean(jnp.abs((target - output) / target))
    assert jnp.allclose(loss, ref, rtol=1e-5, atol=1e-6), (loss, ref)
    print("KERNEL_OK")
</pallas_src>

<mosaic_0001>
module attributes {stable_mosaic.version = 11 : i64} {
  func.func @_mape_kernel(%arg0: i32, %arg1: i32, %arg2: memref<16x128xf32, #tpu.memory_space<vmem>>, %arg3: memref<16x128xf32, #tpu.memory_space<vmem>>, %arg4: memref<1x8x128xf32, #tpu.memory_space<vmem>>, %arg5: memref<8x128xf32, #tpu.memory_space<vmem>>) attributes {dimension_semantics = [#tpu.dimension_semantics<arbitrary>, #tpu.dimension_semantics<arbitrary>], iteration_bounds = array<i64: 1, 1>, scalar_prefetch = 0 : i64, scratch_operands = 1 : i64, tpu.core_type = #tpu.core_type<tc>, window_params = [{transform_indices = @transform_0, window_bounds = array<i64: 16, 128>}, {transform_indices = @transform_1, window_bounds = array<i64: 16, 128>}, {transform_indices = @transform_2, window_bounds = array<i64: 1, 8, 128>}]} {
    %c0_i32 = arith.constant 0 : i32
    %0 = arith.cmpi eq, %arg1, %c0_i32 : i32
    %1 = arith.extui %0 : i1 to i32
    %c0_i32_0 = arith.constant 0 : i32
    %2 = arith.cmpi ne, %1, %c0_i32_0 : i32
    scf.if %2 {
      %cst_10 = arith.constant 0.000000e+00 : f32
      %17 = vector.broadcast %cst_10 : f32 to vector<8x128xf32>
      %c0_11 = arith.constant 0 : index
      %c0_12 = arith.constant 0 : index
      %18 = vector.load %arg5[%c0_11, %c0_12] : memref<8x128xf32, #tpu.memory_space<vmem>>, vector<8x128xf32>
      tpu.vector_store %arg5[%c0_11, %c0_12], %17 {strides = array<i32>} : memref<8x128xf32, #tpu.memory_space<vmem>>, vector<8x128xf32>,
    } else {
    }
    %c0 = arith.constant 0 : index
    %c0_1 = arith.constant 0 : index
    %3 = vector.load %arg2[%c0, %c0_1] : memref<16x128xf32, #tpu.memory_space<vmem>>, vector<16x128xf32>
    %c0_2 = arith.constant 0 : index
    %c0_3 = arith.constant 0 : index
    %4 = vector.load %arg3[%c0_2, %c0_3] : memref<16x128xf32, #tpu.memory_space<vmem>>, vector<16x128xf32>
    %5 = arith.subf %4, %3 : vector<16x128xf32>
    %6 = tpu.reciprocal %4 : vector<16x128xf32> -> vector<16x128xf32>
    %7 = arith.mulf %5, %6 : vector<16x128xf32>
    %8 = math.absf %7 : vector<16x128xf32>
    %c0_4 = arith.constant 0 : index
    %c0_5 = arith.constant 0 : index
    %9 = vector.load %arg5[%c0_4, %c0_5] : memref<8x128xf32, #tpu.memory_space<vmem>>, vector<8x128xf32>
    %10 = vector.shape_cast %8 : vector<16x128xf32> to vector<2x8x128xf32>
    %cst = arith.constant dense<0.000000e+00> : vector<8x128xf32>
    %11 = vector.multi_reduction <add>, %10, %cst [0] : vector<2x8x128xf32> to vector<8x128xf32>
    %12 = arith.addf %9, %11 : vector<8x128xf32>
    %c0_6 = arith.constant 0 : index
    %c0_7 = arith.constant 0 : index
    %13 = vector.load %arg5[%c0_6, %c0_7] : memref<8x128xf32, #tpu.memory_space<vmem>>, vector<8x128xf32>
    tpu.vector_store %arg5[%c0_6, %c0_7], %12 {strides = array<i32>} : memref<8x128xf32, #tpu.memory_space<vmem>>, vector<8x128xf32>,
    %c0_i32_8 = arith.constant 0 : i32
    %14 = arith.cmpi eq, %arg1, %c0_i32_8 : i32
    %15 = arith.extui %14 : i1 to i32
    %c0_i32_9 = arith.constant 0 : i32
    %16 = arith.cmpi ne, %15, %c0_i32_9 : i32
    scf.if %16 {
      %c0_10 = arith.constant 0 : index
      %c0_11 = arith.constant 0 : index
      %17 = vector.load %arg5[%c0_10, %c0_11] : memref<8x128xf32, #tpu.memory_space<vmem>>, vector<8x128xf32>
      %18 = vector.shape_cast %17 : vector<8x128xf32> to vector<1x8x128xf32>
      %c0_12 = arith.constant 0 : index
      %c0_13 = arith.constant 0 : index
      %c0_14 = arith.constant 0 : index
      %19 = vector.load %arg4[%c0_12, %c0_13, %c0_14] : memref<1x8x128xf32, #tpu.memory_space<vmem>>, vector<1x8x128xf32>
      tpu.vector_store %arg4[%c0_12, %c0_13, %c0_14], %18 {strides = array<i32>} : memref<1x8x128xf32, #tpu.memory_space<vmem>>, vector<1x8x128xf32>,
    } else {
    }
    return
  }
  func.func @transform_0(%arg0: i32, %arg1: i32) -> (i32, i32) {
    %c1_i32 = arith.constant 1 : i32
    %0 = arith.muli %arg0, %c1_i32 : i32
    %1 = arith.addi %0, %arg1 : i32
    %c0_i32 = arith.constant 0 : i32
    %2 = arith.minsi %1, %c0_i32 : i32
    %c0_i32_0 = arith.constant 0 : i32
    %c0_i32_1 = arith.constant 0 : i32
    return %2, %c0_i32_0 : i32, i32
  }
  func.func @transform_1(%arg0: i32, %arg1: i32) -> (i32, i32) {
    %c1_i32 = arith.constant 1 : i32
    %0 = arith.muli %arg0, %c1_i32 : i32
    %1 = arith.addi %0, %arg1 : i32
    %c0_i32 = arith.constant 0 : i32
    %2 = arith.minsi %1, %c0_i32 : i32
    %c0_i32_0 = arith.constant 0 : i32
    %c0_i32_1 = arith.constant 0 : i32
    return %2, %c0_i32_0 : i32, i32
  }
  func.func @transform_2(%arg0: i32, %arg1: i32) -> (i32, i32, i32) {
    %c0_i32 = arith.constant 0 : i32
    %c0_i32_0 = arith.constant 0 : i32
    %c0_i32_1 = arith.constant 0 : i32
    return %arg0, %c0_i32, %c0_i32_0 : i32, i32, i32
  }
}

</mosaic_0001>

<llo_original>
// kernel: tpu_custom_call.1
$region0: #{tpu_custom_call.1}
  #allocation0 [shape = 'u32[]', space=smem, size = 0x4, offset = 0x4, fixed_abs, tag = 'smem constant byte address 0x4 - core index']
  #allocation1 [shape = 'u32[144,128]{1,0:T(1,128)}', space=vmem, size = 0x12000, scoped, tag = 'internal scratch']
  #allocation2 [shape = 'f32[8,128]{1,0:T(8,128)}', space=vmem, size = 0x1000, scoped, tag = 'scratch operand']
  %s0 = inlined_call_operand.hbm [shape: f32[16,128], index: 0, kind: input, shape index: {}]
  %s1 = inlined_call_operand.hbm [shape: f32[16,128], index: 1, kind: input, shape index: {}]
  %s2 = inlined_call_operand.hbm [shape: f32[1,8,128], index: 2, kind: output, shape index: {}]
  %s3 = sld [smem:[#allocation0]]
  $region34: #{tpu_custom_call.1} parent=0
    _
  %s5 = ssub.s32 1, %s3
  %s6 = scalar_select 0, %s5, %s3
  $region1: #{tpu_custom_call.1} parent=0
    #allocation3 [shape = 'u8[8192]{0}', space=vmem, size = 0x2000, scoped, tag = 'input window, operand 0, single buffered']
    #allocation4 [shape = 's32[1]{0}', space=sflag, size = 0x4, scoped, tag = 'scoped memory for tpu_custom_call.1']
    #allocation5 [shape = 's32[1]{0}', space=sflag, size = 0x4, scoped, tag = 'scoped memory for tpu_custom_call.1']
    #allocation6 [shape = 'u8[8192]{0}', space=vmem, size = 0x2000, scoped, tag = 'input window, operand 1, single buffered']
    #allocation7 [shape = 's32[1]{0}', space=sflag, size = 0x4, scoped, tag = 'scoped memory for tpu_custom_call.1']
    #allocation8 [shape = 'u8[4096]{0}', space=vmem, size = 0x1000, scoped, tag = 'output window, operand 0, single buffered']
    %7 = vsyncpa [#allocation4], 0
    %8 = vsyncpa [#allocation7], 0
    %9 = vsyncpa [#allocation5], 0
    // Predicated region
    $region2: #{tpu_custom_call.1} parent=1 // pred_check
      _
    $region3: #{tpu_custom_call.1} parent=1 // pred_check_branch
      %11 = sbr.rel (0) target = $region5
    $region4: #{tpu_custom_call.1} parent=1 // pred_region
      %s12 = sadd.s32 0, 0
      %p13 = scmp.lt.s32.totalorder %s12, 0
      %s14 = scalar_select %p13, %s12, 0
      %s15 = smul.u32 2, %s14
      %s17 = ssub.s32 256, 256
      %18 = vsyncadd [#allocation4], %s17
      %s19 = smul.addr %s15, 128
      %s20 = scalar_lea.hbm %s0, %s19
      %s21 = sshll.u32 [#allocation3], 4
      %s22 = int_to_ptr.vmem [resolvable:$true] %s21
      %27 = dma.hbm_to_vmem [thread:$0]  %s20, 256, %s22, [#allocation4], 128, 128, 8
    $region5: #{tpu_custom_call.1} parent=1 // pred_fallthru
      _
    // Predicated region
    $region6: #{tpu_custom_call.1} parent=1 // pred_check
      _
    $region7: #{tpu_custom_call.1} parent=1 // pred_check_branch
      %29 = sbr.rel (0) target = $region9
    $region8: #{tpu_custom_call.1} parent=1 // pred_region
      %s30 = sadd.s32 0, 0
      %p31 = scmp.lt.s32.totalorder %s30, 0
      %s32 = scalar_select %p31, %s30, 0
      %s33 = smul.u32 2, %s32
      %s35 = ssub.s32 256, 256
      %36 = vsyncadd [#allocation7], %s35
      %s37 = smul.addr %s33, 128
      %s38 = scalar_lea.hbm %s1, %s37
      %s39 = sshll.u32 [#allocation6], 4
      %s40 = int_to_ptr.vmem [resolvable:$true] %s39
      %45 = dma.hbm_to_vmem [thread:$0]  %s38, 256, %s40, [#allocation7], 128, 128, 8
    $region9: #{tpu_custom_call.1} parent=1 // pred_fallthru
      _
    // Predicated region
    $region10: #{tpu_custom_call.1} parent=1 // pred_check
      _
    $region11: #{tpu_custom_call.1} parent=1 // pred_check_branch
      %47 = sbr.rel (0) target = $region13
    $region12: #{tpu_custom_call.1} parent=1 // pred_region
      %48 = dma.done [#allocation4], 256
    $region13: #{tpu_custom_call.1} parent=1 // pred_fallthru
      _
    // Predicated region
    $region14: #{tpu_custom_call.1} parent=1 // pred_check
      _
    $region15: #{tpu_custom_call.1} parent=1 // pred_check_branch
      %50 = sbr.rel (0) target = $region17
    $region16: #{tpu_custom_call.1} parent=1 // pred_region
      %51 = dma.done [#allocation7], 256
    $region17: #{tpu_custom_call.1} parent=1 // pred_fallthru
      _
    %s52 = sadd.s32 0, 0
    %p53 = scmp.lt.s32.totalorder %s52, 0
    %s54 = scalar_select %p53, %s52, 0
    %s55 = smul.u32 2, %s54
    %s56 = sadd.s32 0, 0
    %p57 = scmp.lt.s32.totalorder %s56, 0
    %s58 = scalar_select %p57, %s56, 0
    %s59 = smul.u32 2, %s58
    %p60 = scmp.eq.s32.totalorder 0, 0
    // Predicated region
    $region18: #{tpu_custom_call.1} parent=1 // pred_check
      %p61 = pneg %p60
    $region19: #{tpu_custom_call.1} parent=1 // pred_check_branch
      %63 = sbr.rel (%p61) target = $region21
    $region20: #{tpu_custom_call.1} parent=1 // pred_region
      %64 = vst [vmem:[#allocation2] sm:$0xff] 0.0
    $region21: #{tpu_custom_call.1} parent=1 // pred_fallthru
      _
    %v65 = vld [vmem:[#allocation3] sm:$0xff]
    %v66 = vld [vmem:[#allocation3 + $0x8] sm:$0xff]
    %v67 = vld [vmem:[#allocation6] sm:$0xff]
    %v68 = vld [vmem:[#allocation6 + $0x8] sm:$0xff]
    %v69 = vsub.f32 %v67, %v65
    %v70 = vsub.f32 %v68, %v66
    %v71 = vrcp.pop %v67
    %v72 = vrcp.pop %v68
    %v73 = vmul.f32 %v69, %v71
    %v74 = vmul.f32 %v70, %v72
    %v75 = vand.u32 2147483647, %v73
    %v76 = vand.u32 2147483647, %v74
    %v77 = vld [vmem:[#allocation2] sm:$0xff]
    %v78 = vadd.f32 %v75, %v76
    %v79 = vadd.f32 %v77, %v78
    %80 = vst [vmem:[#allocation2] sm:$0xff] %v79
    // Predicated region
    $region22: #{tpu_custom_call.1} parent=1 // pred_check
      %p81 = pneg %p60
    $region23: #{tpu_custom_call.1} parent=1 // pred_check_branch
      %83 = sbr.rel (%p81) target = $region25
    $region24: #{tpu_custom_call.1} parent=1 // pred_region
      %v84 = vld [vmem:[#allocation2] sm:$0xff]
      %85 = vst [vmem:[#allocation8] sm:$0xff] %v84
    $region25: #{tpu_custom_call.1} parent=1 // pred_fallthru
      _
    // Predicated region
    $region26: #{tpu_custom_call.1} parent=1 // pred_check
      _
    $region27: #{tpu_custom_call.1} parent=1 // pred_check_branch
      %87 = sbr.rel (0) target = $region29
    $region28: #{tpu_custom_call.1} parent=1 // pred_region
      %s89 = ssub.s32 128, 128
      %90 = vsyncadd [#allocation5], %s89
      %s92 = sshll.u32 [#allocation8], 4
      %s93 = int_to_ptr.vmem [resolvable:$true] %s92
      %95 = dma.vmem_to_hbm [thread:$0]  %s93, 128, %s2, [#allocation5]
    $region29: #{tpu_custom_call.1} parent=1 // pred_fallthru
      _
    // Predicated region
    $region30: #{tpu_custom_call.1} parent=1 // pred_check
      _
    $region31: #{tpu_custom_call.1} parent=1 // pred_check_branch
      %97 = sbr.rel (0) target = $region33
    $region32: #{tpu_custom_call.1} parent=1 // pred_region
      %98 = dma.done [#allocation5], 128
    $region33: #{tpu_custom_call.1} parent=1 // pred_fallthru
      _
    %99 = vsyncpa [#allocation4], 1
    %100 = vsyncpa [#allocation7], 1
    %101 = vsyncpa [#allocation5], 1

</llo_original>
